<compile_context>
chip_gen: v5e
topology: v5e:2x2
jax: 0.10.0
libtpu: 0.0.40
codegen_flags: <defaults>
</compile_context>

<pallas_src>
import functools
import math

import jax
import jax.numpy as jnp
from jax.experimental import pallas as pl
from jax.experimental.pallas import tpu as pltpu


_SQRT_2_OVER_PI = math.sqrt(2.0 / math.pi)
_INV_SQRT_2 = 1.0 / math.sqrt(2.0)


def _round_up(x, m):
    return ((x + m - 1) // m) * m


def _gelu_f32(h, approximate):
    """GELU in f32. tanh form routes the transcendental to the EUP slot."""
    if approximate:
        return 0.5 * h * (1.0 + jnp.tanh(_SQRT_2_OVER_PI * (h + 0.044715 * (h * h * h))))
    return 0.5 * h * (1.0 + jax.lax.erf(h * _INV_SQRT_2))


def _physical_vmem_bytes():
    try:
        return int(pltpu.get_tpu_info().vmem_capacity_bytes)
    except Exception:
        return 64 * 1024 * 1024  # conservative: v7x per-TensorCore VMEM


def ffn_kernel_fused(x_ref, w1_ref, b1_ref, w2_ref, b2_ref, o_ref, *, approximate):
    """n_f == 1 path: no reduction axis, no accumulator scratch."""
    # linear1 on the MXU: bf16 x bf16 -> f32 accumulate.
    h = jnp.dot(x_ref[...], w1_ref[...], preferred_element_type=jnp.float32)
    h = _gelu_f32(h + b1_ref[...], approximate)          # bias + GELU in f32
    # linear2 on the MXU, finalize straight to the output tile (lane-dense store).
    out = jnp.dot(h.astype(jnp.bfloat16), w2_ref[...], preferred_element_type=jnp.float32)
    o_ref[...] = (out + b2_ref[...]).astype(o_ref.dtype)


def ffn_kernel_acc(x_ref, w1_ref, b1_ref, w2_ref, b2_ref, o_ref, acc_ref, *, approximate):
    """n_f > 1 path: trailing ff reduction axis with an f32 VMEM accumulator."""
    j = pl.program_id(1)

    @pl.when(j == 0)
    def _():
        acc_ref[...] = jnp.zeros_like(acc_ref)

    h = jnp.dot(x_ref[...], w1_ref[...], preferred_element_type=jnp.float32)
    h = _gelu_f32(h + b1_ref[...], approximate)
    acc_ref[...] += jnp.dot(h.astype(jnp.bfloat16), w2_ref[...],
                            preferred_element_type=jnp.float32)

    @pl.when(j == pl.num_programs(1) - 1)
    def _():
        o_ref[...] = (acc_ref[...] + b2_ref[...]).astype(o_ref.dtype)


def _select_tiling(M, d_model, dim_ff, x_bytes, out_bytes, budget):
    """Return (TM, TF, n_f) so all double-buffered tiles fit the VMEM budget."""

    def fixed_bytes(tf):
        # bf16 w1 + w2 tiles (double-buffered) + f32 bias tiles (sublane-padded to 8).
        w = 2 * (d_model * tf * 2 + tf * d_model * 2)
        b = 2 * (8 * tf * 4 + 8 * d_model * 4)
        return w + b

    def per_row_bytes(n_f):
        # Per TM row: bf16 x tile (2 buf) + out tile (2 buf) + f32 accumulator (n_f > 1).
        r = 2 * d_model * x_bytes + 2 * d_model * out_bytes
        if n_f > 1:
            r += d_model * 4
        return r

    def max_tm(left, n_f):
        if left <= 0:
            return 0
        tm = left // per_row_bytes(n_f)
        tm = min(tm, 1024, _round_up(M, 8))
        if tm >= 128:
            tm = (tm // 128) * 128
        else:
            tm = (tm // 8) * 8
        return int(tm)

    # Option 1: keep the whole ff dimension in one block -- weights are DMA'd once and
    # stay VMEM resident across every M tile, and no accumulator is needed.
    tm1 = max_tm(budget - fixed_bytes(dim_ff), 1)
    if tm1 >= min(128, _round_up(M, 8)):
        return tm1, dim_ff, 1

    # Option 2: tile the ff axis (requires 128-multiple tiles to satisfy (8,128)).
    if dim_ff % 128 == 0:
        tm_target = min(512, _round_up(M, 8))
        for tf in range(dim_ff - 128, 0, -128):
            if dim_ff % tf != 0:
                continue
            if budget - fixed_bytes(tf) - tm_target * per_row_bytes(2) >= 0:
                tm = max(tm_target, max_tm(budget - fixed_bytes(tf), 2))
                return tm, tf, dim_ff // tf
        # Even TM=tm_target does not fit with the smallest TF; shrink TM instead.
        tm = max_tm(budget - fixed_bytes(128), 2)
        if tm >= 8:
            return tm, 128, dim_ff // 128

    # Last resort (e.g. dim_ff not a multiple of 128): full-ff block, small TM.
    # TODO(synk): pad dim_ff to a multiple of 128 and mask if this path ever has to
    # handle shapes whose full-ff weights exceed the VMEM budget.
    return max(8, min(128, _round_up(M, 8))), dim_ff, 1


def feed_forward(x, w1, b1, w2, b2, *, approximate_gelu=True):
    """x: (batch, seq, d_model). Returns (out, None) like the PyTorch module.

    w1: (d_model, dim_ff), b1: (dim_ff,), w2: (dim_ff, d_model), b2: (d_model,)
    (weights stored as (in_features, out_features) so the kernel computes x @ W + b).
    """
    batch, seq, d_model = x.shape
    dim_ff = w1.shape[1]
    M = batch * seq

    out_dtype = x.dtype
    out_bytes = jnp.dtype(out_dtype).itemsize

    # bf16 feeds for the MXU: halves weight/x DMA bytes and VMEM footprint.
    w1_bf16 = w1.astype(jnp.bfloat16)
    w2_bf16 = w2.astype(jnp.bfloat16)
    b1_2d = b1.reshape(1, dim_ff).astype(jnp.float32)
    b2_2d = b2.reshape(1, d_model).astype(jnp.float32)

    physical_vmem = _physical_vmem_bytes()
    budget = int(physical_vmem * 0.82)   # ~52 MiB on v7x, ~105 MiB on v5e/v6e

    TM, TF, n_f = _select_tiling(M, d_model, dim_ff, x_bytes=2,
                                 out_bytes=out_bytes, budget=budget)
    M_pad = _round_up(M, TM)
    n_m = M_pad // TM

    x2d = x.reshape(M, d_model).astype(jnp.bfloat16)
    if M_pad != M:
        x2d = jnp.pad(x2d, ((0, M_pad - M), (0, 0)))

    # Advisory cost model: when n_f > 1 the weights are re-streamed once per M tile.
    weight_bytes = w1_bf16.size * 2 + w2_bf16.size * 2
    weight_stream = weight_bytes if n_f == 1 else n_m * weight_bytes
    cost = pl.CostEstimate(
        flops=2 * 2 * M_pad * d_model * dim_ff,
        transcendentals=M_pad * dim_ff,
        bytes_accessed=int(M_pad * d_model * 2 + weight_stream
                           + b1_2d.size * 4 + b2_2d.size * 4
                           + M_pad * d_model * out_bytes),
    )

    if n_f == 1:
        kernel = functools.partial(ffn_kernel_fused, approximate=approximate_gelu)
        grid = (n_m,)
        in_specs = [
            pl.BlockSpec((TM, d_model), lambda i: (i, 0)),       # x tile (bf16)
            pl.BlockSpec((d_model, dim_ff), lambda i: (0, 0)),   # w1 (VMEM resident)
            pl.BlockSpec((1, dim_ff), lambda i: (0, 0)),         # b1 (resident)
            pl.BlockSpec((dim_ff, d_model), lambda i: (0, 0)),   # w2 (resident)
            pl.BlockSpec((1, d_model), lambda i: (0, 0)),        # b2 (resident)
        ]
        out_specs = pl.BlockSpec((TM, d_model), lambda i: (i, 0))
        scratch_shapes = []
        dim_sem = ("parallel",)
    else:
        kernel = functools.partial(ffn_kernel_acc, approximate=approximate_gelu)
        grid = (n_m, n_f)

        # Zig-zag the ff block order per M tile so the last ff tile of M tile i equals
        # the first ff tile of M tile i+1 (saves one weight-tile re-fetch per boundary).
        def ff_idx(i, j):
            return j + (i % 2) * (n_f - 1 - 2 * j)

        in_specs = [
            pl.BlockSpec((TM, d_model), lambda i, j: (i, 0)),            # x tile
            pl.BlockSpec((d_model, TF), lambda i, j: (0, ff_idx(i, j))), # w1 tile
            pl.BlockSpec((1, TF), lambda i, j: (0, ff_idx(i, j))),       # b1 tile
            pl.BlockSpec((TF, d_model), lambda i, j: (ff_idx(i, j), 0)), # w2 tile
            pl.BlockSpec((1, d_model), lambda i, j: (0, 0)),             # b2 (resident)
        ]
        out_specs = pl.BlockSpec((TM, d_model), lambda i, j: (i, 0))
        scratch_shapes = [pltpu.VMEM((TM, d_model), jnp.float32)]
        dim_sem = ("parallel", "arbitrary")

    out2d = pl.pallas_call(
        kernel,
        out_shape=jax.ShapeDtypeStruct((M_pad, d_model), out_dtype),
        grid_spec=pltpu.PrefetchScalarGridSpec(
            num_scalar_prefetch=0,
            grid=grid,
            in_specs=in_specs,
            out_specs=out_specs,
            scratch_shapes=scratch_shapes,
        ),
        compiler_params=pltpu.CompilerParams(
            dimension_semantics=dim_sem,
            vmem_limit_bytes=budget,
        ),
        cost_estimate=cost,
    )(x2d, w1_bf16, b1_2d, w2_bf16, b2_2d)

    out2d = out2d[:M]
    return out2d.reshape(batch, seq, d_model), None


if __name__ == "__main__":
    # Small shapes consistent with the module: (batch, seq, d_model), ff = 2*d_model.
    batch, seq, d_model, dim_ff = 2, 8, 32, 64

    key = jax.random.PRNGKey(0)
    kx, kw1, kb1, kw2, kb2 = jax.random.split(key, 5)

    x = jax.random.normal(kx, (batch, seq, d_model), dtype=jnp.float32)

    # Deterministic init mimicking nn.Linear's uniform(-1/sqrt(fan_in), 1/sqrt(fan_in)).
    bound1 = 1.0 / math.sqrt(d_model)
    w1 = jax.random.uniform(kw1, (d_model, dim_ff), jnp.float32, -bound1, bound1)
    b1 = jax.random.uniform(kb1, (dim_ff,), jnp.float32, -bound1, bound1)
    bound2 = 1.0 / math.sqrt(dim_ff)
    w2 = jax.random.uniform(kw2, (dim_ff, d_model), jnp.float32, -bound2, bound2)
    b2 = jax.random.uniform(kb2, (dim_ff // 2,) if False else (d_model,), jnp.float32,
                            -bound2, bound2)

    out, aux = feed_forward(x, w1, b1, w2, b2)
    jax.block_until_ready(out)
    assert aux is None
    assert out.shape == (batch, seq, d_model)

    x2d = x.reshape(-1, d_model)

    # Tight check against a reference that mirrors the kernel exactly:
    # bf16 x / bf16 weights, f32 accumulate, tanh-approx GELU in f32.
    h_bf = jnp.dot(x2d.astype(jnp.bfloat16), w1.astype(jnp.bfloat16),
                   preferred_element_type=jnp.float32) + b1
    h_bf = _gelu_f32(h_bf, approximate=True)
    ref_bf = (jnp.dot(h_bf.astype(jnp.bfloat16), w2.astype(jnp.bfloat16),
                      preferred_element_type=jnp.float32) + b2).reshape(batch, seq, d_model)
    assert jnp.allclose(out, ref_bf, atol=1e-3, rtol=1e-3), "mismatch vs bf16 reference"

    # Loose check against the exact f32 / erf reference (bf16 MXU + tanh GELU -> ~1e-2).
    h_f32 = x2d @ w1 + b1
    h_f32 = _gelu_f32(h_f32, approximate=False)
    ref_f32 = (h_f32 @ w2 + b2).reshape(batch, seq, d_model)
    assert jnp.allclose(out, ref_f32, atol=5e-2, rtol=5e-2), "mismatch vs f32 reference"

    print("KERNEL_OK")
</pallas_src>

<mosaic_0001>
module attributes {stable_mosaic.version = 11 : i64} {
  func.func @ffn_kernel_fused(%arg0: i32, %arg1: memref<16x32xbf16, #tpu.memory_space<vmem>>, %arg2: memref<32x64xbf16, #tpu.memory_space<vmem>>, %arg3: memref<1x64xf32, #tpu.memory_space<vmem>>, %arg4: memref<64x32xbf16, #tpu.memory_space<vmem>>, %arg5: memref<1x32xf32, #tpu.memory_space<vmem>>, %arg6: memref<16x32xf32, #tpu.memory_space<vmem>>) attributes {dimension_semantics = [#tpu.dimension_semantics<parallel>], iteration_bounds = array<i64: 1>, scalar_prefetch = 0 : i64, scratch_operands = 0 : i64, tpu.core_type = #tpu.core_type<tc>, window_params = [{transform_indices = @transform_0, window_bounds = array<i64: 16, 32>}, {pipeline_mode = #tpu.pipeline_mode<synchronous>, transform_indices = @transform_1, window_bounds = array<i64: 32, 64>}, {pipeline_mode = #tpu.pipeline_mode<synchronous>, transform_indices = @transform_2, window_bounds = array<i64: 1, 64>}, {pipeline_mode = #tpu.pipeline_mode<synchronous>, transform_indices = @transform_3, window_bounds = array<i64: 64, 32>}, {pipeline_mode = #tpu.pipeline_mode<synchronous>, transform_indices = @transform_4, window_bounds = array<i64: 1, 32>}, {transform_indices = @transform_5, window_bounds = array<i64: 16, 32>}]} {
    %c0 = arith.constant 0 : index
    %c0_0 = arith.constant 0 : index
    %0 = vector.load %arg1[%c0, %c0_0] : memref<16x32xbf16, #tpu.memory_space<vmem>>, vector<16x32xbf16>
    %c0_1 = arith.constant 0 : index
    %c0_2 = arith.constant 0 : index
    %1 = vector.load %arg2[%c0_1, %c0_2] : memref<32x64xbf16, #tpu.memory_space<vmem>>, vector<32x64xbf16>
    %cst = arith.constant dense<0.000000e+00> : vector<16x64xf32>
    %2 = tpu.matmul %0, %1, %cst {dimension_numbers = #tpu.dot_dimension_numbers<[1], [0], [0], [1], [0, 0, 1, 1], [], []>} : vector<16x32xbf16>, vector<32x64xbf16>, vector<16x64xf32> -> vector<16x64xf32>
    %c0_3 = arith.constant 0 : index
    %c0_4 = arith.constant 0 : index
    %3 = vector.load %arg3[%c0_3, %c0_4] : memref<1x64xf32, #tpu.memory_space<vmem>>, vector<1x64xf32>
    %4 = vector.broadcast %3 : vector<1x64xf32> to vector<16x64xf32>
    %5 = arith.addf %2, %4 : vector<16x64xf32>
    %cst_5 = arith.constant 5.000000e-01 : f32
    %6 = vector.broadcast %cst_5 : f32 to vector<16x64xf32>
    %7 = arith.mulf %6, %5 : vector<16x64xf32>
    %8 = arith.mulf %5, %5 : vector<16x64xf32>
    %9 = arith.mulf %8, %5 : vector<16x64xf32>
    %cst_6 = arith.constant 4.471500e-02 : f32
    %10 = vector.broadcast %cst_6 : f32 to vector<16x64xf32>
    %11 = arith.mulf %10, %9 : vector<16x64xf32>
    %12 = arith.addf %5, %11 : vector<16x64xf32>
    %cst_7 = arith.constant 0.797884583 : f32
    %13 = vector.broadcast %cst_7 : f32 to vector<16x64xf32>
    %14 = arith.mulf %13, %12 : vector<16x64xf32>
    %15 = math.tanh %14 : vector<16x64xf32>
    %cst_8 = arith.constant 1.000000e+00 : f32
    %16 = vector.broadcast %cst_8 : f32 to vector<16x64xf32>
    %17 = arith.addf %16, %15 : vector<16x64xf32>
    %18 = arith.mulf %7, %17 : vector<16x64xf32>
    %19 = arith.truncf %18 : vector<16x64xf32> to vector<16x64xbf16>
    %c0_9 = arith.constant 0 : index
    %c0_10 = arith.constant 0 : index
    %20 = vector.load %arg4[%c0_9, %c0_10] : memref<64x32xbf16, #tpu.memory_space<vmem>>, vector<64x32xbf16>
    %cst_11 = arith.constant dense<0.000000e+00> : vector<16x32xf32>
    %21 = tpu.matmul %19, %20, %cst_11 {dimension_numbers = #tpu.dot_dimension_numbers<[1], [0], [0], [1], [0, 0, 1, 1], [], []>} : vector<16x64xbf16>, vector<64x32xbf16>, vector<16x32xf32> -> vector<16x32xf32>
    %c0_12 = arith.constant 0 : index
    %c0_13 = arith.constant 0 : index
    %22 = vector.load %arg5[%c0_12, %c0_13] : memref<1x32xf32, #tpu.memory_space<vmem>>, vector<1x32xf32>
    %23 = vector.broadcast %22 : vector<1x32xf32> to vector<16x32xf32>
    %24 = arith.addf %21, %23 : vector<16x32xf32>
    %c0_14 = arith.constant 0 : index
    %c0_15 = arith.constant 0 : index
    %25 = vector.load %arg6[%c0_14, %c0_15] : memref<16x32xf32, #tpu.memory_space<vmem>>, vector<16x32xf32>
    tpu.vector_store %arg6[%c0_14, %c0_15], %24 {strides = array<i32>} : memref<16x32xf32, #tpu.memory_space<vmem>>, vector<16x32xf32>,
    return
  }
  func.func @transform_0(%arg0: i32) -> (i32, i32) {
    %c0_i32 = arith.constant 0 : i32
    %c0_i32_0 = arith.constant 0 : i32
    return %arg0, %c0_i32 : i32, i32
  }
  func.func @transform_1(%arg0: i32) -> (i32, i32) {
    %c0_i32 = arith.constant 0 : i32
    %c0_i32_0 = arith.constant 0 : i32
    %c0_i32_1 = arith.constant 0 : i32
    return %c0_i32, %c0_i32_0 : i32, i32
  }
  func.func @transform_2(%arg0: i32) -> (i32, i32) {
    %c0_i32 = arith.constant 0 : i32
    %c0_i32_0 = arith.constant 0 : i32
    %c0_i32_1 = arith.constant 0 : i32
    return %c0_i32, %c0_i32_0 : i32, i32
  }
  func.func @transform_3(%arg0: i32) -> (i32, i32) {
    %c0_i32 = arith.constant 0 : i32
    %c0_i32_0 = arith.constant 0 : i32
    %c0_i32_1 = arith.constant 0 : i32
    return %c0_i32, %c0_i32_0 : i32, i32
  }
  func.func @transform_4(%arg0: i32) -> (i32, i32) {
    %c0_i32 = arith.constant 0 : i32
    %c0_i32_0 = arith.constant 0 : i32
    %c0_i32_1 = arith.constant 0 : i32
    return %c0_i32, %c0_i32_0 : i32, i32
  }
  func.func @transform_5(%arg0: i32) -> (i32, i32) {
    %c0_i32 = arith.constant 0 : i32
    %c0_i32_0 = arith.constant 0 : i32
    return %arg0, %c0_i32 : i32, i32
  }
}

</mosaic_0001>

<llo_original>
// kernel: tpu_custom_call.1
$region0: #{tpu_custom_call.1}
  #allocation0 [shape = 'u32[]', space=smem, size = 0x4, offset = 0x4, fixed_abs, tag = 'smem constant byte address 0x4 - core index']
  #allocation1 [shape = 'u32[72,128]{1,0:T(1,128)}', space=vmem, size = 0x9000, scoped, tag = 'internal scratch']
  %s0 = inlined_call_operand.vmem [shape: bf16[16,32], index: 0, kind: input, shape index: {}]
  %s1 = inlined_call_operand.vmem [shape: bf16[32,64], index: 1, kind: input, shape index: {}]
  %s2 = inlined_call_operand.vmem [shape: f32[1,64], index: 2, kind: input, shape index: {}]
  %s3 = inlined_call_operand.vmem [shape: bf16[64,32], index: 3, kind: input, shape index: {}]
  %s4 = inlined_call_operand.vmem [shape: f32[1,32], index: 4, kind: input, shape index: {}]
  %s5 = inlined_call_operand.hbm [shape: f32[16,32], index: 5, kind: output, shape index: {}]
  %s6 = sld [smem:[#allocation0]]
  $region30: #{tpu_custom_call.1} parent=0
    _
  %s8 = ssub.s32 1, %s6
  %s9 = scalar_select 0, %s8, %s6
  $region1: #{tpu_custom_call.1} parent=0
    #allocation2 [shape = 'u8[8192]{0}', space=vmem, size = 0x2000, scoped, tag = 'output window, operand 0, single buffered']
    #allocation3 [shape = 's32[1]{0}', space=sflag, size = 0x4, scoped, tag = 'scoped memory for tpu_custom_call.1']
    %10 = vsyncpa [#allocation3], 0
    // Predicated region
    $region2: #{tpu_custom_call.1} parent=1 // pred_check
      _
    $region3: #{tpu_custom_call.1} parent=1 // pred_check_branch
      %12 = sbr.rel (0) target = $region5
    $region4: #{tpu_custom_call.1} parent=1 // pred_region
      _
    $region5: #{tpu_custom_call.1} parent=1 // pred_fallthru
      _
    // Predicated region
    $region6: #{tpu_custom_call.1} parent=1 // pred_check
      _
    $region7: #{tpu_custom_call.1} parent=1 // pred_check_branch
      %14 = sbr.rel (0) target = $region9
    $region8: #{tpu_custom_call.1} parent=1 // pred_region
      _
    $region9: #{tpu_custom_call.1} parent=1 // pred_fallthru
      _
    // Predicated region
    $region10: #{tpu_custom_call.1} parent=1 // pred_check
      _
    $region11: #{tpu_custom_call.1} parent=1 // pred_check_branch
      %16 = sbr.rel (0) target = $region13
    $region12: #{tpu_custom_call.1} parent=1 // pred_region
      _
    $region13: #{tpu_custom_call.1} parent=1 // pred_fallthru
      _
    // Predicated region
    $region14: #{tpu_custom_call.1} parent=1 // pred_check
      _
    $region15: #{tpu_custom_call.1} parent=1 // pred_check_branch
      %18 = sbr.rel (0) target = $region17
    $region16: #{tpu_custom_call.1} parent=1 // pred_region
      _
    $region17: #{tpu_custom_call.1} parent=1 // pred_fallthru
      _
    // Predicated region
    $region18: #{tpu_custom_call.1} parent=1 // pred_check
      _
    $region19: #{tpu_custom_call.1} parent=1 // pred_check_branch
      %20 = sbr.rel (0) target = $region21
    $region20: #{tpu_custom_call.1} parent=1 // pred_region
      _
    $region21: #{tpu_custom_call.1} parent=1 // pred_fallthru
      _
    %v22 = vld [vmem:[%s0] sm:$0xf]
    %v23 = vld [vmem:[%s0 + $0x4] sm:$0xf]
    %v24 = vld [vmem:[%s1] sm:$0xf]
    %v25 = vld [vmem:[%s1 + $0x4] sm:$0xf]
    %v26 = vld [vmem:[%s1 + $0x8] sm:$0xf]
    %v27 = vld [vmem:[%s1 + $0xc] sm:$0xf]
    %v28 = vld [vmem:[%s2] sm:$0x1]
    %v30 = vperm.slane %v28, 0
    %v34 = vunpack.c.l.b16 %v22
    %v35 = vunpack.c.l.b16 %v23
    %v36 = vpack.c.b16 %v35, %v34
    %v41 = vunpack.c.l.b16 %v24
    %v42 = vunpack.c.l.b16 %v25
    %v43 = vunpack.c.l.b16 %v26
    %v44 = vunpack.c.l.b16 %v27
    %v45 = vpack.c.b16 %v42, %v41
    %v46 = vpack.c.b16 %v44, %v43
    %vm49 = vcmask 261120
    %v51 = vsel %vm49, %v36, 0
    %53 = vmatpush.bf16.msra.mxu0 0
    %54 = vmatpush.bf16.msra.mxu0 0
    %55 = vmatpush.bf16.msra.mxu0 0
    %56 = vmatpush.bf16.msra.mxu0 0
    %57 = vmatpush.bf16.msra.mxu0 0
    %58 = vmatpush.bf16.msra.mxu0 0
    %59 = vmatpush.bf16.msra.mxu0 %v46
    %60 = vmatpush.bf16.msra.mxu0 %v45
    %61 = vmatmul.bf16.gmra.mxu0 %v51
    %v62 = vpop.f32.mrf.mxu0
    %v63 = vadd.f32 %v30, %v62
    %v64 = vpop.f32.mrf.mxu0
    %v65 = vadd.f32 %v30, %v64
    %66 = vdwg.mxu0
    %v67 = vmul.f32 %v63, 0.5
    %v68 = vmul.f32 %v65, 0.5
    %v69 = vmul.f32 %v63, %v63
    %v70 = vmul.f32 %v65, %v65
    %v71 = vmul.f32 %v69, %v63
    %v72 = vmul.f32 %v70, %v65
    %v73 = vmul.f32 %v71, 0.044715
    %v74 = vmul.f32 %v72, 0.044715
    %v75 = vadd.f32 %v63, %v73
    %v76 = vadd.f32 %v65, %v74
    %v77 = vmul.f32 %v75, 0.7978846
    %v78 = vmul.f32 %v76, 0.7978846
    %v79 = vtanh.pop %v77
    %v80 = vtanh.pop %v78
    %v81 = vadd.f32 %v79, 1.0
    %v82 = vadd.f32 %v80, 1.0
    %v83 = vmul.f32 %v67, %v81
    %v84 = vmul.f32 %v68, %v82
    %v85 = vpack.c.bf16 %v84, %v83
    %v86 = vld [vmem:[%s3] sm:$0xf]
    %v87 = vld [vmem:[%s3 + $0x4] sm:$0xf]
    %v88 = vld [vmem:[%s3 + $0x8] sm:$0xf]
    %v89 = vld [vmem:[%s3 + $0xc] sm:$0xf]
    %v90 = vld [vmem:[%s3 + $0x10] sm:$0xf]
    %v91 = vld [vmem:[%s3 + $0x14] sm:$0xf]
    %v92 = vld [vmem:[%s3 + $0x18] sm:$0xf]
    %v93 = vld [vmem:[%s3 + $0x1c] sm:$0xf]
    %v94 = vld [vmem:[%s4] sm:$0x1]
    %v96 = vperm.slane %v94, 0
    %v106 = vunpack.c.l.b16 %v86
    %v107 = vunpack.c.l.b16 %v87
    %v108 = vunpack.c.l.b16 %v88
    %v109 = vunpack.c.l.b16 %v89
    %v110 = vunpack.c.l.b16 %v90
    %v111 = vunpack.c.l.b16 %v91
    %v112 = vunpack.c.l.b16 %v92
    %v113 = vunpack.c.l.b16 %v93
    %v114 = vpack.c.b16 %v107, %v106
    %v115 = vpack.c.b16 %v109, %v108
    %v116 = vpack.c.b16 %v111, %v110
    %v117 = vpack.c.b16 %v113, %v112
    %vm122 = vcmask 523264
    %v124 = vsel %vm122, %v85, 0
    %126 = vmatpush.bf16.msra.mxu0 0
    %127 = vmatpush.bf16.msra.mxu0 0
    %128 = vmatpush.bf16.msra.mxu0 0
    %129 = vmatpush.bf16.msra.mxu0 0
    %130 = vmatpush.bf16.msra.mxu0 %v117
    %131 = vmatpush.bf16.msra.mxu0 %v116
    %132 = vmatpush.bf16.msra.mxu0 %v115
    %133 = vmatpush.bf16.msra.mxu0 %v114
    %134 = vmatmul.bf16.gmra.mxu0 %v124
    %v135 = vpop.f32.mrf.mxu0
    %v136 = vadd.f32 %v96, %v135
    %v137 = vpop.f32.mrf.mxu0
    %v138 = vadd.f32 %v96, %v137
    %139 = vdwg.mxu0
    %140 = vst.msk [vmem:[#allocation2] sm:$0xff] %vm49, %v136
    %141 = vst.msk [vmem:[#allocation2 + $0x8] sm:$0xff] %vm49, %v138
    // Predicated region
    $region22: #{tpu_custom_call.1} parent=1 // pred_check
      _
    $region23: #{tpu_custom_call.1} parent=1 // pred_check_branch
      %143 = sbr.rel (0) target = $region25
    $region24: #{tpu_custom_call.1} parent=1 // pred_region
      %145 = vsyncadd [#allocation3], 0
      %s146 = sshll.u32 [#allocation2], 4
      %s147 = int_to_ptr.vmem [resolvable:$true] %s146
      %s148 = sshll.u32 %s5, 4
      %s149 = int_to_ptr.hbm [resolvable:$true] %s148
      %154 = dma.vmem_to_hbm [thread:$0]  %s147, 256, %s149, [#allocation3], 128, 128, 8
    $region25: #{tpu_custom_call.1} parent=1 // pred_fallthru
      _
    // Predicated region
    $region26: #{tpu_custom_call.1} parent=1 // pred_check
      _
    $region27: #{tpu_custom_call.1} parent=1 // pred_check_branch
      %156 = sbr.rel (0) target = $region29
    $region28: #{tpu_custom_call.1} parent=1 // pred_region
      %158 = dma.done [#allocation3], 256
    $region29: #{tpu_custom_call.1} parent=1 // pred_fallthru
      _
    %159 = vsyncpa [#allocation3], 1

</llo_original>
